<compile_context>
chip_gen: v5e
topology: v5e:2x2
jax: 0.10.0
libtpu: 0.0.40
codegen_flags: <defaults>
</compile_context>

<pallas_src>
import functools

import jax
import jax.numpy as jnp
from jax.experimental import pallas as pl
from jax.experimental.pallas import tpu as pltpu

_LANES = 128
_SUBLANES = 8


def _dispact_kernel(x_ref, o_ref):
    # Compute in f32 (v5e has no bf16 VPU/EUP); HBM I/O stays in native dtype.
    x = x_ref[...].astype(jnp.float32)
    # PyTorch F.softplus(x) with default beta=1, threshold=20:
    #   softplus(x) = x                if x > 20
    #               = log1p(exp(x))    otherwise
    safe_x = jnp.minimum(x, 20.0)  # avoid exp overflow on the masked branch
    sp = jnp.where(x > 20.0, x, jnp.log1p(jnp.exp(safe_x)))
    # torch.clamp(sp, min=1e-4, max=1e4)
    o_ref[...] = jnp.clip(sp, 0.0001, 10000.0).astype(o_ref.dtype)


def _pick_lane_width(n: int):
    """Largest 'nice' lane-dense width (multiple of 128) that divides n."""
    for c in (4096, 2048, 1024, 512, 256, 128):
        if n % c == 0:
            return c
    return None


def _pick_row_block(rows: int, max_rows: int):
    """Largest multiple-of-8 divisor of `rows` that is <= max_rows."""
    t = min(rows, max_rows)
    t -= t % _SUBLANES
    while t >= _SUBLANES:
        if rows % t == 0:
            return t
        t -= _SUBLANES
    return None


@functools.partial(jax.jit, static_argnames=("target_block_bytes",))
def dispact(x: jax.Array, *, target_block_bytes: int = 2 * 1024 * 1024) -> jax.Array:
    """Elementwise clamp(softplus(x), 1e-4, 1e4) via a Pallas TPU kernel."""
    orig_shape = x.shape
    dtype = x.dtype
    n = x.size
    if n == 0:
        return x

    itemsize = jnp.dtype(dtype).itemsize
    flat = x.reshape(-1)

    # --- choose a lane-dense 2-D layout (rows, C), C a large multiple of 128 ---
    C = _pick_lane_width(n)
    if C is None:
        # Rare: n not a multiple of 128 -> pad the tail (extra HBM pass, but
        # only on awkward sizes; typical NCHW tensors skip this entirely).
        C = 1024 if n >= 1024 else _LANES
    padded_n = ((n + C - 1) // C) * C
    rows = padded_n // C

    # --- choose the row block: ~target_block_bytes per grid step ---
    target_rows = max(_SUBLANES, target_block_bytes // (C * itemsize))
    tr = _pick_row_block(rows, target_rows)
    if tr is None:
        if rows * C * itemsize <= 2 * target_block_bytes:
            # Small enough to run as a single (full-extent) block.
            tr = rows
        else:
            # No multiple-of-8 divisor of rows <= target: pad rows up so a
            # clean multiple-of-8 block divides them (keeps the pipeline and
            # bounded VMEM for any shape).
            tr = (target_rows // _SUBLANES) * _SUBLANES
            rows = ((rows + tr - 1) // tr) * tr
            padded_n = rows * C

    pad = padded_n - n
    if pad:
        flat = jnp.pad(flat, (0, pad))

    x2d = flat.reshape(rows, C)
    grid = (rows // tr,)

    out2d = pl.pallas_call(
        _dispact_kernel,
        out_shape=jax.ShapeDtypeStruct((rows, C), dtype),
        grid=grid,
        in_specs=[pl.BlockSpec((tr, C), lambda i: (i, 0))],
        out_specs=pl.BlockSpec((tr, C), lambda i: (i, 0)),
        # "parallel" lets the grid shard across v7x's 2 TensorCores; ~neutral
        # on single-TC v5e/v6e.
        compiler_params=pltpu.CompilerParams(
            dimension_semantics=("parallel",),
        ),
    )(x2d)

    out = out2d.reshape(-1)
    if pad:
        out = out[:n]
    return out.reshape(orig_shape)


def _reference_dispact(x: jax.Array) -> jax.Array:
    x32 = x.astype(jnp.float32)
    sp = jnp.where(x32 > 20.0, x32, jnp.log1p(jnp.exp(jnp.minimum(x32, 20.0))))
    return jnp.clip(sp, 0.0001, 10000.0).astype(x.dtype)


if __name__ == "__main__":
    key = jax.random.PRNGKey(0)
    # NCHW input, as the PyTorch module would receive.
    x = jax.random.normal(key, (2, 4, 16, 16), dtype=jnp.float32) * 5.0

    y = dispact(x)
    y = jax.block_until_ready(y)

    y_ref = _reference_dispact(x)
    assert y.shape == x.shape and y.dtype == x.dtype
    assert jnp.allclose(y, y_ref, atol=1e-6, rtol=1e-6)

    print("KERNEL_OK")
</pallas_src>

<mosaic_0001>
module attributes {stable_mosaic.version = 11 : i64} {
  func.func @_dispact_kernel(%arg0: i32, %arg1: memref<1x2048xf32, #tpu.memory_space<vmem>>, %arg2: memref<1x2048xf32, #tpu.memory_space<vmem>>) attributes {dimension_semantics = [#tpu.dimension_semantics<parallel>], iteration_bounds = array<i64: 1>, scalar_prefetch = 0 : i64, scratch_operands = 0 : i64, tpu.core_type = #tpu.core_type<tc>, window_params = [{transform_indices = @transform_0, window_bounds = array<i64: 1, 2048>}, {transform_indices = @transform_1, window_bounds = array<i64: 1, 2048>}]} {
    %c0 = arith.constant 0 : index
    %c0_0 = arith.constant 0 : index
    %0 = vector.load %arg1[%c0, %c0_0] : memref<1x2048xf32, #tpu.memory_space<vmem>>, vector<1x2048xf32>
    %cst = arith.constant 2.000000e+01 : f32
    %1 = vector.broadcast %cst : f32 to vector<1x2048xf32>
    %2 = arith.minimumf %0, %1 : vector<1x2048xf32>
    %cst_1 = arith.constant 2.000000e+01 : f32
    %3 = vector.broadcast %cst_1 : f32 to vector<1x2048xf32>
    %4 = arith.cmpf ogt, %0, %3 : vector<1x2048xf32>
    %5 = math.exp %2 : vector<1x2048xf32>
    %6 = math.log1p %5 : vector<1x2048xf32>
    %7 = arith.select %4, %0, %6 : vector<1x2048xi1>, vector<1x2048xf32>
    %cst_2 = arith.constant 9.99999974E-5 : f32
    %cst_3 = arith.constant 1.000000e+04 : f32
    %8 = vector.broadcast %cst_2 : f32 to vector<1x2048xf32>
    %9 = arith.maximumf %8, %7 : vector<1x2048xf32>
    %10 = vector.broadcast %cst_3 : f32 to vector<1x2048xf32>
    %11 = arith.minimumf %10, %9 : vector<1x2048xf32>
    %c0_4 = arith.constant 0 : index
    %c0_5 = arith.constant 0 : index
    %12 = vector.load %arg2[%c0_4, %c0_5] : memref<1x2048xf32, #tpu.memory_space<vmem>>, vector<1x2048xf32>
    tpu.vector_store %arg2[%c0_4, %c0_5], %11 {strides = array<i32>} : memref<1x2048xf32, #tpu.memory_space<vmem>>, vector<1x2048xf32>,
    return
  }
  func.func @transform_0(%arg0: i32) -> (i32, i32) {
    %c0_i32 = arith.constant 0 : i32
    %c0_i32_0 = arith.constant 0 : i32
    return %arg0, %c0_i32 : i32, i32
  }
  func.func @transform_1(%arg0: i32) -> (i32, i32) {
    %c0_i32 = arith.constant 0 : i32
    %c0_i32_0 = arith.constant 0 : i32
    return %arg0, %c0_i32 : i32, i32
  }
}

</mosaic_0001>

<llo_original>
// kernel: dispact.1
$region0: #{dispact.1}
  #allocation0 [shape = 'u32[]', space=smem, size = 0x4, offset = 0x4, fixed_abs, tag = 'smem constant byte address 0x4 - core index']
  #allocation1 [shape = 'u32[72,128]{1,0:T(1,128)}', space=vmem, size = 0x9000, scoped, tag = 'internal scratch']
  %s0 = inlined_call_operand.vmem [shape: f32[1,2048], index: 0, kind: input, shape index: {}]
  %s1 = inlined_call_operand.vmem [shape: f32[1,2048], index: 1, kind: output, shape index: {}]
  %s2 = sld [smem:[#allocation0]]
  $region14: #{dispact.1} parent=0
    _
  %s4 = ssub.s32 1, %s2
  %s5 = scalar_select 0, %s4, %s2
  // Predicated region
  $region2: #{dispact.1} parent=0 // pred_check
    _
  $region3: #{dispact.1} parent=0 // pred_check_branch
    %7 = sbr.rel (0) target = $region5
  $region4: #{dispact.1} parent=0 // pred_region
    _
  $region5: #{dispact.1} parent=0 // pred_fallthru
    _
  %v8 = vld [vmem:[%s0] sm:$0xff]
  %v9 = vld [vmem:[%s0 + $0x8] sm:$0xff]
  %v10 = vmin.f32 %v8, 20.0
  %v11 = vmin.f32 %v9, 20.0
  %vm12 = vcmp.gt.f32.partialorder %v8, 20.0
  %vm13 = vcmp.gt.f32.partialorder %v9, 20.0
  %v14 = vmul.f32 %v10, 1.442695
  %v15 = vpow.pop %v14
  %v16 = vmul.f32 %v11, 1.442695
  %v17 = vpow.pop %v16
  %v18 = vadd.f32 %v15, 1.0
  %v19 = vlog2.pop %v18
  %v20 = vmul.f32 %v19, 0.6931472
  %v21 = vmul.f32 -0.5, %v15
  %v22 = vadd.f32 %v21, 1.0
  %v23 = vmul.f32 %v22, %v15
  %v24 = vand.u32 2147483647, %v15
  %vm25 = vcmp.lt.f32.partialorder %v24, 0.0004427343
  %v26 = vsel %vm25, %v23, %v20
  %v27 = vadd.f32 %v17, 1.0
  %v28 = vlog2.pop %v27
  %v29 = vmul.f32 %v28, 0.6931472
  %v30 = vmul.f32 -0.5, %v17
  %v31 = vadd.f32 %v30, 1.0
  %v32 = vmul.f32 %v31, %v17
  %v33 = vand.u32 2147483647, %v17
  %vm34 = vcmp.lt.f32.partialorder %v33, 0.0004427343
  %v35 = vsel %vm34, %v32, %v29
  %v36 = vsel %vm12, %v8, %v26
  %v37 = vsel %vm13, %v9, %v35
  %v38 = vmax.f32 %v36, 0.0001
  %v39 = vmax.f32 %v37, 0.0001
  %v40 = vmin.f32 %v38, 10000.0
  %v41 = vmin.f32 %v39, 10000.0
  %42 = vst [vmem:[%s1] sm:$0xff] %v40
  %43 = vst [vmem:[%s1 + $0x8] sm:$0xff] %v41
  // Predicated region
  $region6: #{dispact.1} parent=0 // pred_check
    _
  $region7: #{dispact.1} parent=0 // pred_check_branch
    %45 = sbr.rel (0) target = $region9
  $region8: #{dispact.1} parent=0 // pred_region
    _
  $region9: #{dispact.1} parent=0 // pred_fallthru
    _
  // Predicated region
  $region10: #{dispact.1} parent=0 // pred_check
    _
  $region11: #{dispact.1} parent=0 // pred_check_branch
    %47 = sbr.rel (0) target = $region13
  $region12: #{dispact.1} parent=0 // pred_region
    _
  $region13: #{dispact.1} parent=0 // pred_fallthru
    _

</llo_original>
